<compile_context>
chip_gen: v6e
topology: v6e:2x2x1
jax: 0.10.0
libtpu: 0.0.40
codegen_flags: <defaults>
</compile_context>

<pallas_src>
import functools
import math

import jax
import jax.numpy as jnp
from jax.experimental import pallas as pl
from jax.experimental.pallas import tpu as pltpu


def _round_up(n, m):
    return ((n + m - 1) // m) * m


# ----------------------------- Pallas kernel ------------------------------- #

def _fused_mlp_kernel(*refs, relu_flags):
    """Fused MLP: h = x; per layer: h = h @ W + b (f32 acc); optional ReLU.

    refs = (x_ref, w0_ref, b0_ref, w1_ref, b1_ref, ..., o_ref)
    Activations stay in vregs/VMEM; only the final result is written out.
    Weights are bf16 (MXU inputs), biases f32; epilogue runs in f32.
    """
    x_ref = refs[0]
    o_ref = refs[-1]
    num_layers = len(relu_flags)

    h = x_ref[...]                                    # bf16 activations
    for l in range(num_layers):
        w = refs[1 + 2 * l][...]                      # bf16 (fin, fout_pad)
        b = refs[2 + 2 * l][...]                      # f32  (1,  fout_pad)
        acc = jnp.dot(h, w, preferred_element_type=jnp.float32) + b
        if relu_flags[l]:
            acc = jnp.maximum(acc, 0.0)
        if l + 1 < num_layers:
            h = acc.astype(x_ref.dtype)               # bf16 for next MXU pass
        else:
            h = acc                                   # keep final in f32
    o_ref[...] = h.astype(o_ref.dtype)


# ------------------------------- Wrapper ------------------------------------ #

def proj_forward(x, weights, biases, relu_flags, *, block_m=None,
                 compute_dtype=jnp.bfloat16, lane=128):
    """Proj.forward: single fused pallas_call over the whole Linear/ReLU chain.

    x:       (B, latent_dim) float
    weights: list of (fan_in, fan_out) matrices (BN already folded if any)
    biases:  list of (fan_out,) vectors
    """
    x = jnp.asarray(x)
    B, d_in = x.shape
    d_out_true = weights[-1].shape[1]

    # --- lane-pad every fan_out (hidden + output) dim to 128 so MXU outputs
    #     and the kernel's store are lane-dense (no masked partial stores).
    #     Zero columns stay zero through bias(0)/ReLU and hit zero weight rows
    #     in the next layer, so results are unchanged. ------------------------
    padded_w, padded_b = [], []
    prev_pad = 0                       # zero rows to add to this layer's fan_in
    for w, b in zip(weights, biases):
        fin, fout = w.shape
        fout_pad = _round_up(fout, lane)
        w_p = jnp.pad(jnp.asarray(w, jnp.float32),
                      ((0, prev_pad), (0, fout_pad - fout)))
        b_p = jnp.pad(jnp.asarray(b, jnp.float32), (0, fout_pad - fout))
        padded_w.append(w_p.astype(compute_dtype))
        padded_b.append(b_p.reshape(1, -1))            # keep bias in f32
        prev_pad = fout_pad - fout
    d_out_pad = padded_w[-1].shape[1]

    # --- batch tiling: fixed block_m, batch padded to a multiple of it -------
    if block_m is None:
        if B < 16:
            block_m = _round_up(B, 8)                  # one small block
        else:
            # >= 2 blocks (v7x megacore), up to 1024 rows per block.
            block_m = min(1024, _round_up(pl.cdiv(B, 2), 8))
    B_pad = _round_up(B, block_m)
    grid = (B_pad // block_m,)

    x_c = x.astype(compute_dtype)
    if B_pad != B:
        x_c = jnp.pad(x_c, ((0, B_pad - B), (0, 0)))

    in_specs = [pl.BlockSpec((block_m, d_in), lambda i: (i, 0))]
    flat_params = []
    for w, b in zip(padded_w, padded_b):
        in_specs.append(pl.BlockSpec(w.shape, lambda i: (0, 0)))
        in_specs.append(pl.BlockSpec(b.shape, lambda i: (0, 0)))
        flat_params += [w, b]

    kernel = functools.partial(_fused_mlp_kernel, relu_flags=tuple(relu_flags))

    out = pl.pallas_call(
        kernel,
        out_shape=jax.ShapeDtypeStruct((B_pad, d_out_pad), jnp.float32),
        grid=grid,
        in_specs=in_specs,
        out_specs=pl.BlockSpec((block_m, d_out_pad), lambda i: (i, 0)),
        compiler_params=pltpu.CompilerParams(
            dimension_semantics=("parallel",)),
    )(x_c, *flat_params)

    return out[:B, :d_out_true]


# ------------------------------ Param init ---------------------------------- #

def _fold_batchnorm(w, b, gamma, beta, running_mean, running_var, eps=1e-5):
    """Fold an eval-mode BatchNorm1d into the preceding Linear (w, b)."""
    scale = gamma / jnp.sqrt(running_var + eps)
    w_f = w * scale[None, :]
    b_f = b * scale + (beta - running_mean * scale)
    return w_f, b_f


def init_params(key, Lvpj, latent_dim, depth=2, bnorm=False):
    """Mirror Projector(Lvpj, latent_dim, bnorm, depth): Linear/[BN]/ReLU stack."""
    dims = [(latent_dim, Lvpj[0])]
    for _ in range(depth - 2):
        dims.append((Lvpj[0], Lvpj[0]))
    dims.append((Lvpj[0], Lvpj[1]))
    num_layers = len(dims)

    weights, biases, relu_flags = [], [], []
    for idx, (fin, fout) in enumerate(dims):
        key, kw, kb = jax.random.split(key, 3)
        bound = 1.0 / math.sqrt(fin)       # PyTorch nn.Linear default init
        w = jax.random.uniform(kw, (fin, fout), jnp.float32, -bound, bound)
        b = jax.random.uniform(kb, (fout,), jnp.float32, -bound, bound)

        is_last = idx == num_layers - 1
        if bnorm and not is_last:
            key, kg, kbt = jax.random.split(key, 3)
            gamma = 1.0 + 0.1 * jax.random.normal(kg, (fout,), jnp.float32)
            beta = 0.1 * jax.random.normal(kbt, (fout,), jnp.float32)
            running_mean = jnp.zeros((fout,), jnp.float32)
            running_var = jnp.ones((fout,), jnp.float32)
            w, b = _fold_batchnorm(w, b, gamma, beta, running_mean, running_var)

        weights.append(w)
        biases.append(b)
        relu_flags.append(not is_last)

    return weights, biases, relu_flags


def _reference_forward(x, weights, biases, relu_flags):
    h = x.astype(jnp.float32)
    for w, b, r in zip(weights, biases, relu_flags):
        h = h @ w + b
        if r:
            h = jnp.maximum(h, 0.0)
    return h


# --------------------------------- main -------------------------------------- #

if __name__ == "__main__":
    # Proj(Lvpj=[64, 32], latent_dim=32, bnorm=False, depth=2)
    latent_dim = 32
    Lvpj = [64, 32]
    depth = 2
    bnorm = False
    batch = 8

    key = jax.random.PRNGKey(0)
    weights, biases, relu_flags = init_params(
        key, Lvpj, latent_dim, depth=depth, bnorm=bnorm)

    x = jax.random.normal(jax.random.fold_in(key, 123),
                          (batch, latent_dim), dtype=jnp.float32)

    fwd = jax.jit(lambda inp: proj_forward(inp, weights, biases, relu_flags))
    out = jax.block_until_ready(fwd(x))

    assert out.shape == (batch, Lvpj[1]), out.shape
    assert bool(jnp.all(jnp.isfinite(out)))

    # Loose check vs. pure-JAX f32 reference (bf16 MXU inputs, f32 accumulate).
    ref = _reference_forward(x, weights, biases, relu_flags)
    assert bool(jnp.allclose(out, ref, atol=5e-2, rtol=5e-2))

    print("KERNEL_OK")
</pallas_src>

<mosaic_0001>
module attributes {stable_mosaic.version = 11 : i64} {
  func.func @_fused_mlp_kernel(%arg0: i32, %arg1: memref<8x32xbf16, #tpu.memory_space<vmem>>, %arg2: memref<32x128xbf16, #tpu.memory_space<vmem>>, %arg3: memref<1x128xf32, #tpu.memory_space<vmem>>, %arg4: memref<128x128xbf16, #tpu.memory_space<vmem>>, %arg5: memref<1x128xf32, #tpu.memory_space<vmem>>, %arg6: memref<8x128xf32, #tpu.memory_space<vmem>>) attributes {dimension_semantics = [#tpu.dimension_semantics<parallel>], iteration_bounds = array<i64: 1>, scalar_prefetch = 0 : i64, scratch_operands = 0 : i64, tpu.core_type = #tpu.core_type<tc>, window_params = [{transform_indices = @transform_0, window_bounds = array<i64: 8, 32>}, {pipeline_mode = #tpu.pipeline_mode<synchronous>, transform_indices = @transform_1, window_bounds = array<i64: 32, 128>}, {pipeline_mode = #tpu.pipeline_mode<synchronous>, transform_indices = @transform_2, window_bounds = array<i64: 1, 128>}, {pipeline_mode = #tpu.pipeline_mode<synchronous>, transform_indices = @transform_3, window_bounds = array<i64: 128, 128>}, {pipeline_mode = #tpu.pipeline_mode<synchronous>, transform_indices = @transform_4, window_bounds = array<i64: 1, 128>}, {transform_indices = @transform_5, window_bounds = array<i64: 8, 128>}]} {
    %c0 = arith.constant 0 : index
    %c0_0 = arith.constant 0 : index
    %0 = vector.load %arg1[%c0, %c0_0] : memref<8x32xbf16, #tpu.memory_space<vmem>>, vector<8x32xbf16>
    %c0_1 = arith.constant 0 : index
    %c0_2 = arith.constant 0 : index
    %1 = vector.load %arg2[%c0_1, %c0_2] : memref<32x128xbf16, #tpu.memory_space<vmem>>, vector<32x128xbf16>
    %c0_3 = arith.constant 0 : index
    %c0_4 = arith.constant 0 : index
    %2 = vector.load %arg3[%c0_3, %c0_4] : memref<1x128xf32, #tpu.memory_space<vmem>>, vector<1x128xf32>
    %cst = arith.constant dense<0.000000e+00> : vector<8x128xf32>
    %3 = tpu.matmul %0, %1, %cst {dimension_numbers = #tpu.dot_dimension_numbers<[1], [0], [0], [1], [0, 0, 1, 1], [], []>} : vector<8x32xbf16>, vector<32x128xbf16>, vector<8x128xf32> -> vector<8x128xf32>
    %4 = vector.broadcast %2 : vector<1x128xf32> to vector<8x128xf32>
    %5 = arith.addf %3, %4 : vector<8x128xf32>
    %cst_5 = arith.constant 0.000000e+00 : f32
    %6 = vector.broadcast %cst_5 : f32 to vector<8x128xf32>
    %7 = arith.maximumf %5, %6 : vector<8x128xf32>
    %8 = arith.truncf %7 : vector<8x128xf32> to vector<8x128xbf16>
    %c0_6 = arith.constant 0 : index
    %c0_7 = arith.constant 0 : index
    %9 = vector.load %arg4[%c0_6, %c0_7] : memref<128x128xbf16, #tpu.memory_space<vmem>>, vector<128x128xbf16>
    %c0_8 = arith.constant 0 : index
    %c0_9 = arith.constant 0 : index
    %10 = vector.load %arg5[%c0_8, %c0_9] : memref<1x128xf32, #tpu.memory_space<vmem>>, vector<1x128xf32>
    %cst_10 = arith.constant dense<0.000000e+00> : vector<8x128xf32>
    %11 = tpu.matmul %8, %9, %cst_10 {dimension_numbers = #tpu.dot_dimension_numbers<[1], [0], [0], [1], [0, 0, 1, 1], [], []>} : vector<8x128xbf16>, vector<128x128xbf16>, vector<8x128xf32> -> vector<8x128xf32>
    %12 = vector.broadcast %10 : vector<1x128xf32> to vector<8x128xf32>
    %13 = arith.addf %11, %12 : vector<8x128xf32>
    %c0_11 = arith.constant 0 : index
    %c0_12 = arith.constant 0 : index
    %14 = vector.load %arg6[%c0_11, %c0_12] : memref<8x128xf32, #tpu.memory_space<vmem>>, vector<8x128xf32>
    tpu.vector_store %arg6[%c0_11, %c0_12], %13 {strides = array<i32>} : memref<8x128xf32, #tpu.memory_space<vmem>>, vector<8x128xf32>,
    return
  }
  func.func @transform_0(%arg0: i32) -> (i32, i32) {
    %c0_i32 = arith.constant 0 : i32
    %c0_i32_0 = arith.constant 0 : i32
    return %arg0, %c0_i32 : i32, i32
  }
  func.func @transform_1(%arg0: i32) -> (i32, i32) {
    %c0_i32 = arith.constant 0 : i32
    %c0_i32_0 = arith.constant 0 : i32
    %c0_i32_1 = arith.constant 0 : i32
    return %c0_i32, %c0_i32_0 : i32, i32
  }
  func.func @transform_2(%arg0: i32) -> (i32, i32) {
    %c0_i32 = arith.constant 0 : i32
    %c0_i32_0 = arith.constant 0 : i32
    %c0_i32_1 = arith.constant 0 : i32
    return %c0_i32, %c0_i32_0 : i32, i32
  }
  func.func @transform_3(%arg0: i32) -> (i32, i32) {
    %c0_i32 = arith.constant 0 : i32
    %c0_i32_0 = arith.constant 0 : i32
    %c0_i32_1 = arith.constant 0 : i32
    return %c0_i32, %c0_i32_0 : i32, i32
  }
  func.func @transform_4(%arg0: i32) -> (i32, i32) {
    %c0_i32 = arith.constant 0 : i32
    %c0_i32_0 = arith.constant 0 : i32
    %c0_i32_1 = arith.constant 0 : i32
    return %c0_i32, %c0_i32_0 : i32, i32
  }
  func.func @transform_5(%arg0: i32) -> (i32, i32) {
    %c0_i32 = arith.constant 0 : i32
    %c0_i32_0 = arith.constant 0 : i32
    return %arg0, %c0_i32 : i32, i32
  }
}

</mosaic_0001>

<llo_original>
// kernel: _lambda_.1
$region0: #{_lambda_.1}
  #allocation0 [shape = 'u32[]', space=smem, size = 0x4, offset = 0x4, fixed_abs, tag = 'smem constant byte address 0x4 - core index']
  #allocation1 [shape = 'u32[144,128]{1,0:T(1,128)}', space=vmem, size = 0x12000, scoped, tag = 'internal scratch']
  %s0 = inlined_call_operand.vmem [shape: bf16[8,32], index: 0, kind: input, shape index: {}]
  %s1 = inlined_call_operand.hbm [shape: bf16[32,128], index: 1, kind: input, shape index: {}]
  %s2 = inlined_call_operand.vmem [shape: f32[1,128], index: 2, kind: input, shape index: {}]
  %s3 = inlined_call_operand.hbm [shape: bf16[128,128], index: 3, kind: input, shape index: {}]
  %s4 = inlined_call_operand.vmem [shape: f32[1,128], index: 4, kind: input, shape index: {}]
  %s5 = inlined_call_operand.hbm [shape: f32[8,128], index: 5, kind: output, shape index: {}]
  %s6 = sld [smem:[#allocation0]]
  $region38: #{_lambda_.1} parent=0
    _
  %s8 = ssub.s32 1, %s6
  %s9 = scalar_select 0, %s8, %s6
  $region1: #{_lambda_.1} parent=0
    #allocation2 [shape = 'u8[8192]{0}', space=vmem, size = 0x2000, scoped, tag = 'input window, operand 1, single buffered']
    #allocation3 [shape = 's32[1]{0}', space=sflag, size = 0x4, scoped, tag = 'scoped memory for _lambda_.1']
    #allocation4 [shape = 's32[1]{0}', space=sflag, size = 0x4, scoped, tag = 'scoped memory for _lambda_.1']
    #allocation5 [shape = 'u8[32768]{0}', space=vmem, size = 0x8000, scoped, tag = 'input window, operand 3, single buffered']
    #allocation6 [shape = 's32[1]{0}', space=sflag, size = 0x4, scoped, tag = 'scoped memory for _lambda_.1']
    #allocation7 [shape = 'u8[4096]{0}', space=vmem, size = 0x1000, scoped, tag = 'output window, operand 0, single buffered']
    %10 = vsyncpa [#allocation3], 0
    %11 = vsyncpa [#allocation6], 0
    %12 = vsyncpa [#allocation4], 0
    // Predicated region
    $region2: #{_lambda_.1} parent=1 // pred_check
      _
    $region3: #{_lambda_.1} parent=1 // pred_check_branch
      %14 = sbr.rel (0) target = $region5
    $region4: #{_lambda_.1} parent=1 // pred_region
      _
    $region5: #{_lambda_.1} parent=1 // pred_fallthru
      _
    // Predicated region
    $region6: #{_lambda_.1} parent=1 // pred_check
      _
    $region7: #{_lambda_.1} parent=1 // pred_check_branch
      %16 = sbr.rel (0) target = $region9
    $region8: #{_lambda_.1} parent=1 // pred_region
      %s18 = ssub.s32 256, 256
      %19 = vsyncadd [#allocation3], %s18
      %s20 = sshll.u32 [#allocation2], 4
      %s21 = int_to_ptr.vmem [resolvable:$true] %s20
      %26 = dma.hbm_to_vmem [thread:$0]  %s1, 256, %s21, [#allocation3], 64, 64, 4
    $region9: #{_lambda_.1} parent=1 // pred_fallthru
      _
    // Predicated region
    $region10: #{_lambda_.1} parent=1 // pred_check
      _
    $region11: #{_lambda_.1} parent=1 // pred_check_branch
      %28 = sbr.rel (0) target = $region13
    $region12: #{_lambda_.1} parent=1 // pred_region
      _
    $region13: #{_lambda_.1} parent=1 // pred_fallthru
      _
    // Predicated region
    $region14: #{_lambda_.1} parent=1 // pred_check
      _
    $region15: #{_lambda_.1} parent=1 // pred_check_branch
      %30 = sbr.rel (0) target = $region17
    $region16: #{_lambda_.1} parent=1 // pred_region
      %s32 = ssub.s32 1024, 1024
      %33 = vsyncadd [#allocation6], %s32
      %s34 = sshll.u32 [#allocation5], 4
      %s35 = int_to_ptr.vmem [resolvable:$true] %s34
      %40 = dma.hbm_to_vmem [thread:$0]  %s3, 1024, %s35, [#allocation6], 64, 64, 4
    $region17: #{_lambda_.1} parent=1 // pred_fallthru
      _
    // Predicated region
    $region18: #{_lambda_.1} parent=1 // pred_check
      _
    $region19: #{_lambda_.1} parent=1 // pred_check_branch
      %42 = sbr.rel (0) target = $region21
    $region20: #{_lambda_.1} parent=1 // pred_region
      _
    $region21: #{_lambda_.1} parent=1 // pred_fallthru
      _
    // Predicated region
    $region22: #{_lambda_.1} parent=1 // pred_check
      _
    $region23: #{_lambda_.1} parent=1 // pred_check_branch
      %44 = sbr.rel (0) target = $region25
    $region24: #{_lambda_.1} parent=1 // pred_region
      %45 = dma.done [#allocation3], 256
    $region25: #{_lambda_.1} parent=1 // pred_fallthru
      _
    // Predicated region
    $region26: #{_lambda_.1} parent=1 // pred_check
      _
    $region27: #{_lambda_.1} parent=1 // pred_check_branch
      %47 = sbr.rel (0) target = $region29
    $region28: #{_lambda_.1} parent=1 // pred_region
      %48 = dma.done [#allocation6], 1024
    $region29: #{_lambda_.1} parent=1 // pred_fallthru
      _
    %v50 = vld [vmem:[%s0] sm:$0xf]
    %v51 = vld [vmem:[#allocation2] sm:$0xf]
    %v52 = vld [vmem:[#allocation2 + $0x4] sm:$0xf]
    %v53 = vld [vmem:[#allocation2 + $0x8] sm:$0xf]
    %v54 = vld [vmem:[#allocation2 + $0xc] sm:$0xf]
    %v55 = vld [vmem:[%s2] sm:$0x1]
    %v57 = vlaneseq
    %v58 = vshrl.u32 %v57, 7
    %v59 = vsub.s32 0, %v58
    %v60 = vrot.slane %v55, %v59
    %v66 = vunpack.c.l.b16 %v51
    %v67 = vunpack.c.l.b16 %v52
    %v68 = vunpack.c.l.b16 %v53
    %v69 = vunpack.c.l.b16 %v54
    %v70 = vpack.c.b16 %v67, %v66
    %v71 = vpack.c.b16 %v69, %v68
    %vm74 = vcmask 261120
    %v76 = vsel %vm74, %v50, 0
    %78 = vmatprep.subr.bf16.mxu0 0
    %79 = vmatpush1.bf16.msra.mxu0 0
    %80 = vmatprep.subr.bf16.mxu0 0
    %81 = vmatpush1.bf16.msra.mxu0 0
    %82 = vmatprep.subr.bf16.mxu0 0
    %83 = vmatpush1.bf16.msra.mxu0 0
    %84 = vmatprep.subr.bf16.mxu0 0
    %85 = vmatpush1.bf16.msra.mxu0 0
    %86 = vmatprep.subr.bf16.mxu0 0
    %87 = vmatpush1.bf16.msra.mxu0 0
    %88 = vmatprep.subr.bf16.mxu0 0
    %89 = vmatpush1.bf16.msra.mxu0 0
    %90 = vmatprep.subr.bf16.mxu0 0
    %91 = vmatpush1.bf16.msra.mxu0 %v71
    %92 = vmatprep.subr.bf16.mxu0 0
    %93 = vmatpush1.bf16.msra.mxu0 %v70
    %94 = vmatprep.subr.bf16.mxu0 0
    %95 = vmatpush2.bf16.msra.mxu0 0
    %96 = vmatprep.subr.bf16.mxu0 0
    %97 = vmatpush2.bf16.msra.mxu0 0
    %98 = vmatprep.subr.bf16.mxu0 0
    %99 = vmatpush2.bf16.msra.mxu0 0
    %100 = vmatprep.subr.bf16.mxu0 0
    %101 = vmatpush2.bf16.msra.mxu0 0
    %102 = vmatprep.subr.bf16.mxu0 0
    %103 = vmatpush2.bf16.msra.mxu0 0
    %104 = vmatprep.subr.bf16.mxu0 0
    %105 = vmatpush2.bf16.msra.mxu0 0
    %106 = vmatprep.subr.bf16.mxu0 0
    %107 = vmatpush2.bf16.msra.mxu0 0
    %108 = vmatprep.subr.bf16.mxu0 0
    %109 = vmatpush2.bf16.msra.mxu0 0
    %110 = vmatprep.mubr.bf16.mxu0 0
    %111 = vmatmul.mubr.bf16.gmra.mxu0 %v76
    %v112 = vpop.f32.mrf.mxu0
    %v113 = vadd.f32 %v60, %v112
    %v114 = vpop.f32.mrf.mxu0
    %v115 = vpop.f32.mrf.mxu0
    %v116 = vpop.f32.mrf.mxu0
    %117 = vdwg.mxu0
    %v118 = vmax.f32 %v113, 0.0
    %v119 = vpack.c.bf16 %v118, %v118
    %v120 = vld [vmem:[#allocation5] sm:$0xf]
    %v121 = vld [vmem:[#allocation5 + $0x4] sm:$0xf]
    %v122 = vld [vmem:[#allocation5 + $0x8] sm:$0xf]
    %v123 = vld [vmem:[#allocation5 + $0xc] sm:$0xf]
    %v124 = vld [vmem:[#allocation5 + $0x10] sm:$0xf]
    %v125 = vld [vmem:[#allocation5 + $0x14] sm:$0xf]
    %v126 = vld [vmem:[#allocation5 + $0x18] sm:$0xf]
    %v127 = vld [vmem:[#allocation5 + $0x1c] sm:$0xf]
    %v128 = vld [vmem:[#allocation5 + $0x20] sm:$0xf]
    %v129 = vld [vmem:[#allocation5 + $0x24] sm:$0xf]
    %v130 = vld [vmem:[#allocation5 + $0x28] sm:$0xf]
    %v131 = vld [vmem:[#allocation5 + $0x2c] sm:$0xf]
    %v132 = vld [vmem:[#allocation5 + $0x30] sm:$0xf]
    %v133 = vld [vmem:[#allocation5 + $0x34] sm:$0xf]
    %v134 = vld [vmem:[#allocation5 + $0x38] sm:$0xf]
    %v135 = vld [vmem:[#allocation5 + $0x3c] sm:$0xf]
    %v136 = vld [vmem:[%s4] sm:$0x1]
    %v138 = vlaneseq
    %v139 = vshrl.u32 %v138, 7
    %v140 = vsub.s32 0, %v139
    %v141 = vrot.slane %v136, %v140
    %v159 = vunpack.c.l.b16 %v120
    %v160 = vunpack.c.l.b16 %v121
    %v161 = vunpack.c.l.b16 %v122
    %v162 = vunpack.c.l.b16 %v123
    %v163 = vunpack.c.l.b16 %v124
    %v164 = vunpack.c.l.b16 %v125
    %v165 = vunpack.c.l.b16 %v126
    %v166 = vunpack.c.l.b16 %v127
    %v167 = vunpack.c.l.b16 %v128
    %v168 = vunpack.c.l.b16 %v129
    %v169 = vunpack.c.l.b16 %v130
    %v170 = vunpack.c.l.b16 %v131
    %v171 = vunpack.c.l.b16 %v132
    %v172 = vunpack.c.l.b16 %v133
    %v173 = vunpack.c.l.b16 %v134
    %v174 = vunpack.c.l.b16 %v135
    %v175 = vpack.c.b16 %v160, %v159
    %v176 = vpack.c.b16 %v162, %v161
    %v177 = vpack.c.b16 %v164, %v163
    %v178 = vpack.c.b16 %v166, %v165
    %v179 = vpack.c.b16 %v168, %v167
    %v180 = vpack.c.b16 %v170, %v169
    %v181 = vpack.c.b16 %v172, %v171
    %v182 = vpack.c.b16 %v174, %v173
    %191 = vmatprep.subr.bf16.mxu0 0
    %192 = vmatpush1.bf16.msra.mxu0 %v182
    %193 = vmatprep.subr.bf16.mxu0 0
    %194 = vmatpush1.bf16.msra.mxu0 %v181
    %195 = vmatprep.subr.bf16.mxu0 0
    %196 = vmatpush1.bf16.msra.mxu0 %v180
    %197 = vmatprep.subr.bf16.mxu0 0
    %198 = vmatpush1.bf16.msra.mxu0 %v179
    %199 = vmatprep.subr.bf16.mxu0 0
    %200 = vmatpush1.bf16.msra.mxu0 %v178
    %201 = vmatprep.subr.bf16.mxu0 0
    %202 = vmatpush1.bf16.msra.mxu0 %v177
    %203 = vmatprep.subr.bf16.mxu0 0
    %204 = vmatpush1.bf16.msra.mxu0 %v176
    %205 = vmatprep.subr.bf16.mxu0 0
    %206 = vmatpush1.bf16.msra.mxu0 %v175
    %207 = vmatprep.subr.bf16.mxu0 0
    %208 = vmatpush2.bf16.msra.mxu0 0
    %209 = vmatprep.subr.bf16.mxu0 0
    %210 = vmatpush2.bf16.msra.mxu0 0
    %211 = vmatprep.subr.bf16.mxu0 0
    %212 = vmatpush2.bf16.msra.mxu0 0
    %213 = vmatprep.subr.bf16.mxu0 0
    %214 = vmatpush2.bf16.msra.mxu0 0
    %215 = vmatprep.subr.bf16.mxu0 0
    %216 = vmatpush2.bf16.msra.mxu0 0
    %217 = vmatprep.subr.bf16.mxu0 0
    %218 = vmatpush2.bf16.msra.mxu0 0
    %219 = vmatprep.subr.bf16.mxu0 0
    %220 = vmatpush2.bf16.msra.mxu0 0
    %221 = vmatprep.subr.bf16.mxu0 0
    %222 = vmatpush2.bf16.msra.mxu0 0
    %223 = vmatprep.mubr.bf16.mxu0 0
    %224 = vmatmul.mubr.bf16.gmra.mxu0 %v119
    %v225 = vpop.f32.mrf.mxu0
    %v226 = vadd.f32 %v141, %v225
    %v227 = vpop.f32.mrf.mxu0
    %v228 = vpop.f32.mrf.mxu0
    %v229 = vpop.f32.mrf.mxu0
    %230 = vdwg.mxu0
    %231 = vst [vmem:[#allocation7] sm:$0xff] %v226
    // Predicated region
    $region30: #{_lambda_.1} parent=1 // pred_check
      _
    $region31: #{_lambda_.1} parent=1 // pred_check_branch
      %233 = sbr.rel (0) target = $region33
    $region32: #{_lambda_.1} parent=1 // pred_region
      %s235 = ssub.s32 128, 128
      %236 = vsyncadd [#allocation4], %s235
      %s238 = sshll.u32 [#allocation7], 4
      %s239 = int_to_ptr.vmem [resolvable:$true] %s238
      %241 = dma.vmem_to_hbm [thread:$0]  %s239, 128, %s5, [#allocation4]
    $region33: #{_lambda_.1} parent=1 // pred_fallthru
      _
    // Predicated region
    $region34: #{_lambda_.1} parent=1 // pred_check
      _
    $region35: #{_lambda_.1} parent=1 // pred_check_branch
      %243 = sbr.rel (0) target = $region37
    $region36: #{_lambda_.1} parent=1 // pred_region
      %244 = dma.done [#allocation4], 128
    $region37: #{_lambda_.1} parent=1 // pred_fallthru
      _
    %245 = vsyncpa [#allocation3], 1
    %246 = vsyncpa [#allocation6], 1
    %247 = vsyncpa [#allocation4], 1

</llo_original>
